<compile_context>
chip_gen: v7x
topology: tpu7x:2x2x1
jax: 0.10.0
libtpu: 0.0.40
codegen_flags: <defaults>
</compile_context>

<pallas_src>
import functools

import jax
import jax.numpy as jnp
from jax.experimental import pallas as pl
from jax.experimental.pallas import tpu as pltpu


# ----------------------------------------------------------------------------
# Kernel: the entire PsiCritic forward in one invocation (no grid).
# ----------------------------------------------------------------------------
def _fused_kernel(x_ref, w1_ref, b1_ref, w2_ref, b2_ref, w3_ref, b3_ref,
                  w4_ref, b4_ref, out_ref):
    # bf16 operands -> MXU native rate; f32 accumulation + f32 biases/epilogue.
    x = x_ref[...].astype(jnp.bfloat16)                                   # (B, sf)

    h = jnp.dot(x, w1_ref[...], preferred_element_type=jnp.float32) + b1_ref[...]
    h = jnp.maximum(h, 0.0).astype(jnp.bfloat16)
    h = jnp.dot(h, w2_ref[...], preferred_element_type=jnp.float32) + b2_ref[...]
    h = jnp.maximum(h, 0.0).astype(jnp.bfloat16)
    h = jnp.dot(h, w3_ref[...], preferred_element_type=jnp.float32) + b3_ref[...]
    h = jnp.maximum(h, 0.0).astype(jnp.bfloat16)

    # Layer 4 weights already encode the full epilogue:
    #   columns [0, a_dim*sf)            -> psi          (state + adv_k - mean_j adv_j)
    #   columns [a_dim*sf, 2*a_dim*sf)   -> psiAdvantage
    #   columns [2*a_dim*sf, ... )       -> psiState (zero-padded to a 128 multiple)
    out_ref[...] = jnp.dot(h, w4_ref[...],
                           preferred_element_type=jnp.float32) + b4_ref[...]


# ----------------------------------------------------------------------------
# Wrapper
# ----------------------------------------------------------------------------
@functools.partial(jax.jit, static_argnums=(2,))
def psi_critic_forward(x, packed_params, a_dim):
    """x: (B, sf_dim) f32; packed_params from pack_params().

    Returns (psi, {'psiState': (B, sf), 'psiAdvantage': (B, a_dim, sf)}).
    """
    B, sf_dim = x.shape
    w1p, b1p, w2p, b2p, w3p, b3p, w4p, b4p = packed_params
    hf = w1p.shape[1]            # H * fc_dim
    out_w = w4p.shape[1]         # padded [psi | adv | state] width (multiple of 128)
    aw = a_dim * sf_dim

    flops = 2 * B * (sf_dim * hf + 2 * hf * hf + hf * out_w)
    bytes_accessed = (
        x.size * 4
        + (w1p.size + w2p.size + w3p.size + w4p.size) * 2     # bf16 weights
        + (b1p.size + b2p.size + b3p.size + b4p.size) * 4     # f32 biases
        + B * out_w * 4                                        # output
    )

    vmem_spec = pl.BlockSpec(memory_space=pltpu.MemorySpace.VMEM)

    out = pl.pallas_call(
        _fused_kernel,
        out_shape=jax.ShapeDtypeStruct((B, out_w), jnp.float32),
        in_specs=[vmem_spec] * 9,
        out_specs=vmem_spec,
        cost_estimate=pl.CostEstimate(
            flops=flops, transcendentals=0, bytes_accessed=bytes_accessed),
    )(x, w1p, b1p, w2p, b2p, w3p, b3p, w4p, b4p)

    # Free row-major slices/reshapes to the PyTorch layout (done by XLA, outside).
    psi = out[:, :aw].reshape(B, a_dim, sf_dim)
    psi_adv = out[:, aw:2 * aw].reshape(B, a_dim, sf_dim)
    psi_state = out[:, 2 * aw:2 * aw + sf_dim]
    return psi, {"psiState": psi_state, "psiAdvantage": psi_adv}


# ----------------------------------------------------------------------------
# One-time weight repack (outside the jitted forward):
#   layer 1: head-stacked columns; layers 2-3: block-diagonal;
#   layer 4: block-diagonal + folded psi epilogue + lane padding; all weights bf16.
# ----------------------------------------------------------------------------
def _block_diag(blocks):
    H = len(blocks)
    m, n = blocks[0].shape
    out = jnp.zeros((H * m, H * n), jnp.float32)
    for h, blk in enumerate(blocks):
        out = out.at[h * m:(h + 1) * m, h * n:(h + 1) * n].set(blk)
    return out


def _pack_layer4(w4, b4, a_dim, sf_dim, fc_dim):
    """Builds W4p/b4p so that  h_packed @ W4p + b4p = [psi | adv | state_padded]."""
    H = a_dim + 1
    aw = a_dim * sf_dim
    total = 2 * aw + sf_dim
    out_w = ((total + 127) // 128) * 128      # pad to lane-dense multiple of 128
    W = jnp.zeros((H * fc_dim, out_w), jnp.float32)
    b = jnp.zeros((1, out_w), jnp.float32)
    inv_a = 1.0 / a_dim
    b4_mean = jnp.mean(b4[:a_dim], axis=0)    # (sf,)

    for k in range(a_dim):
        # --- psi column block k: state + adv_k - mean_j adv_j ---
        c0 = k * sf_dim
        for j in range(a_dim):
            r0 = j * fc_dim
            coeff = (1.0 if j == k else 0.0) - inv_a
            W = W.at[r0:r0 + fc_dim, c0:c0 + sf_dim].add(coeff * w4[j])
        rs = a_dim * fc_dim                   # state head rows
        W = W.at[rs:rs + fc_dim, c0:c0 + sf_dim].add(w4[a_dim])
        b = b.at[0, c0:c0 + sf_dim].set(b4[k] + b4[a_dim] - b4_mean)

        # --- adv column block k ---
        ca = aw + k * sf_dim
        W = W.at[k * fc_dim:(k + 1) * fc_dim, ca:ca + sf_dim].set(w4[k])
        b = b.at[0, ca:ca + sf_dim].set(b4[k])

    # --- state columns (remaining lanes stay zero) ---
    cs = 2 * aw
    rs = a_dim * fc_dim
    W = W.at[rs:rs + fc_dim, cs:cs + sf_dim].set(w4[a_dim])
    b = b.at[0, cs:cs + sf_dim].set(b4[a_dim])
    return W, b


def pack_params(params, a_dim):
    """params: per-head (H, in, out) weights / (H, out) biases, head a_dim = psi_state."""
    w1, b1, w2, b2, w3, b3, w4, b4 = params
    H = a_dim + 1
    sf_dim = w1.shape[1]
    fc_dim = w1.shape[2]

    W1p = jnp.concatenate([w1[h] for h in range(H)], axis=1)     # (sf, H*fc)
    W2p = _block_diag([w2[h] for h in range(H)])                 # (H*fc, H*fc)
    W3p = _block_diag([w3[h] for h in range(H)])                 # (H*fc, H*fc)
    W4p, b4p = _pack_layer4(w4, b4, a_dim, sf_dim, fc_dim)       # (H*fc, out_w)

    b1p = b1.reshape(1, -1)
    b2p = b2.reshape(1, -1)
    b3p = b3.reshape(1, -1)

    # bf16 weights (halves weight DMA, native MXU rate); biases stay f32.
    to_bf16 = lambda w: w.astype(jnp.bfloat16)
    return (to_bf16(W1p), b1p, to_bf16(W2p), b2p,
            to_bf16(W3p), b3p, to_bf16(W4p), b4p)


# ----------------------------------------------------------------------------
# Synthetic init + pure-JAX f32 reference
# ----------------------------------------------------------------------------
def init_params(key, sf_dim, fc_dim, a_dim):
    """Heads 0..a_dim-1 = PsiAdvantage MLPs, head a_dim = psi_state MLP."""
    H = a_dim + 1
    ks = jax.random.split(key, 8)
    scale = 0.1
    w1 = scale * jax.random.normal(ks[0], (H, sf_dim, fc_dim), jnp.float32)
    b1 = scale * jax.random.normal(ks[1], (H, fc_dim), jnp.float32)
    w2 = scale * jax.random.normal(ks[2], (H, fc_dim, fc_dim), jnp.float32)
    b2 = scale * jax.random.normal(ks[3], (H, fc_dim), jnp.float32)
    w3 = scale * jax.random.normal(ks[4], (H, fc_dim, fc_dim), jnp.float32)
    b3 = scale * jax.random.normal(ks[5], (H, fc_dim), jnp.float32)
    w4 = scale * jax.random.normal(ks[6], (H, fc_dim, sf_dim), jnp.float32)
    b4 = scale * jax.random.normal(ks[7], (H, sf_dim), jnp.float32)
    return (w1, b1, w2, b2, w3, b3, w4, b4)


def _reference(x, params, a_dim):
    w1, b1, w2, b2, w3, b3, w4, b4 = params

    def one_head(h_idx):
        h = jnp.maximum(x @ w1[h_idx] + b1[h_idx], 0.0)
        h = jnp.maximum(h @ w2[h_idx] + b2[h_idx], 0.0)
        h = jnp.maximum(h @ w3[h_idx] + b3[h_idx], 0.0)
        return h @ w4[h_idx] + b4[h_idx]

    heads = jnp.stack([one_head(i) for i in range(a_dim + 1)], axis=0)
    adv = jnp.transpose(heads[:a_dim], (1, 0, 2))                # (B, a_dim, sf)
    state = heads[a_dim]                                         # (B, sf)
    psi = state[:, None, :] + adv - jnp.mean(adv, axis=1, keepdims=True)
    return psi, state, adv


if __name__ == "__main__":
    # a_dim * sf_dim = 128 -> psi / adv column groups are exactly lane-dense.
    B, sf_dim, fc_dim, a_dim = 8, 32, 32, 4

    key = jax.random.PRNGKey(0)
    kx, kp = jax.random.split(key)
    x = jax.random.normal(kx, (B, sf_dim), jnp.float32)
    params = init_params(kp, sf_dim, fc_dim, a_dim)
    packed = pack_params(params, a_dim)   # one-time repack, outside the jitted forward

    psi, aux = psi_critic_forward(x, packed, a_dim)
    psi = jax.block_until_ready(psi)
    psi_state = jax.block_until_ready(aux["psiState"])
    psi_adv = jax.block_until_ready(aux["psiAdvantage"])

    ref_psi, ref_state, ref_adv = _reference(x, params, a_dim)
    assert psi.shape == (B, a_dim, sf_dim)
    assert psi_state.shape == (B, sf_dim)
    assert psi_adv.shape == (B, a_dim, sf_dim)
    # bf16 weights / bf16 activations with f32 accumulation: compare to the f32
    # reference at a tolerance consistent with bf16 rounding.
    assert jnp.allclose(psi, ref_psi, atol=3e-2, rtol=3e-2)
    assert jnp.allclose(psi_state, ref_state, atol=3e-2, rtol=3e-2)
    assert jnp.allclose(psi_adv, ref_adv, atol=3e-2, rtol=3e-2)

    print("KERNEL_OK")
</pallas_src>

<mosaic_0001>
module attributes {stable_mosaic.version = 11 : i64} {
  func.func @_fused_kernel(%arg0: memref<8x32xf32, #tpu.memory_space<vmem>>, %arg1: memref<32x160xbf16, #tpu.memory_space<vmem>>, %arg2: memref<1x160xf32, #tpu.memory_space<vmem>>, %arg3: memref<160x160xbf16, #tpu.memory_space<vmem>>, %arg4: memref<1x160xf32, #tpu.memory_space<vmem>>, %arg5: memref<160x160xbf16, #tpu.memory_space<vmem>>, %arg6: memref<1x160xf32, #tpu.memory_space<vmem>>, %arg7: memref<160x384xbf16, #tpu.memory_space<vmem>>, %arg8: memref<1x384xf32, #tpu.memory_space<vmem>>, %arg9: memref<8x384xf32, #tpu.memory_space<vmem>>) attributes {dimension_semantics = [], scalar_prefetch = 0 : i64, scratch_operands = 0 : i64, tpu.core_type = #tpu.core_type<tc>} {
    %c0 = arith.constant 0 : index
    %c0_0 = arith.constant 0 : index
    %0 = vector.load %arg0[%c0, %c0_0] : memref<8x32xf32, #tpu.memory_space<vmem>>, vector<8x32xf32>
    %1 = arith.truncf %0 : vector<8x32xf32> to vector<8x32xbf16>
    %c0_1 = arith.constant 0 : index
    %c0_2 = arith.constant 0 : index
    %2 = vector.load %arg1[%c0_1, %c0_2] : memref<32x160xbf16, #tpu.memory_space<vmem>>, vector<32x160xbf16>
    %cst = arith.constant dense<0.000000e+00> : vector<8x160xf32>
    %3 = tpu.matmul %1, %2, %cst {dimension_numbers = #tpu.dot_dimension_numbers<[1], [0], [0], [1], [0, 0, 1, 1], [], []>} : vector<8x32xbf16>, vector<32x160xbf16>, vector<8x160xf32> -> vector<8x160xf32>
    %c0_3 = arith.constant 0 : index
    %c0_4 = arith.constant 0 : index
    %4 = vector.load %arg2[%c0_3, %c0_4] : memref<1x160xf32, #tpu.memory_space<vmem>>, vector<1x160xf32>
    %5 = vector.broadcast %4 : vector<1x160xf32> to vector<8x160xf32>
    %6 = arith.addf %3, %5 : vector<8x160xf32>
    %cst_5 = arith.constant 0.000000e+00 : f32
    %7 = vector.broadcast %cst_5 : f32 to vector<8x160xf32>
    %8 = arith.maximumf %6, %7 : vector<8x160xf32>
    %9 = arith.truncf %8 : vector<8x160xf32> to vector<8x160xbf16>
    %c0_6 = arith.constant 0 : index
    %c0_7 = arith.constant 0 : index
    %10 = vector.load %arg3[%c0_6, %c0_7] : memref<160x160xbf16, #tpu.memory_space<vmem>>, vector<160x160xbf16>
    %cst_8 = arith.constant dense<0.000000e+00> : vector<8x160xf32>
    %11 = tpu.matmul %9, %10, %cst_8 {dimension_numbers = #tpu.dot_dimension_numbers<[1], [0], [0], [1], [0, 0, 1, 1], [], []>} : vector<8x160xbf16>, vector<160x160xbf16>, vector<8x160xf32> -> vector<8x160xf32>
    %c0_9 = arith.constant 0 : index
    %c0_10 = arith.constant 0 : index
    %12 = vector.load %arg4[%c0_9, %c0_10] : memref<1x160xf32, #tpu.memory_space<vmem>>, vector<1x160xf32>
    %13 = vector.broadcast %12 : vector<1x160xf32> to vector<8x160xf32>
    %14 = arith.addf %11, %13 : vector<8x160xf32>
    %cst_11 = arith.constant 0.000000e+00 : f32
    %15 = vector.broadcast %cst_11 : f32 to vector<8x160xf32>
    %16 = arith.maximumf %14, %15 : vector<8x160xf32>
    %17 = arith.truncf %16 : vector<8x160xf32> to vector<8x160xbf16>
    %c0_12 = arith.constant 0 : index
    %c0_13 = arith.constant 0 : index
    %18 = vector.load %arg5[%c0_12, %c0_13] : memref<160x160xbf16, #tpu.memory_space<vmem>>, vector<160x160xbf16>
    %cst_14 = arith.constant dense<0.000000e+00> : vector<8x160xf32>
    %19 = tpu.matmul %17, %18, %cst_14 {dimension_numbers = #tpu.dot_dimension_numbers<[1], [0], [0], [1], [0, 0, 1, 1], [], []>} : vector<8x160xbf16>, vector<160x160xbf16>, vector<8x160xf32> -> vector<8x160xf32>
    %c0_15 = arith.constant 0 : index
    %c0_16 = arith.constant 0 : index
    %20 = vector.load %arg6[%c0_15, %c0_16] : memref<1x160xf32, #tpu.memory_space<vmem>>, vector<1x160xf32>
    %21 = vector.broadcast %20 : vector<1x160xf32> to vector<8x160xf32>
    %22 = arith.addf %19, %21 : vector<8x160xf32>
    %cst_17 = arith.constant 0.000000e+00 : f32
    %23 = vector.broadcast %cst_17 : f32 to vector<8x160xf32>
    %24 = arith.maximumf %22, %23 : vector<8x160xf32>
    %25 = arith.truncf %24 : vector<8x160xf32> to vector<8x160xbf16>
    %c0_18 = arith.constant 0 : index
    %c0_19 = arith.constant 0 : index
    %26 = vector.load %arg7[%c0_18, %c0_19] : memref<160x384xbf16, #tpu.memory_space<vmem>>, vector<160x384xbf16>
    %cst_20 = arith.constant dense<0.000000e+00> : vector<8x384xf32>
    %27 = tpu.matmul %25, %26, %cst_20 {dimension_numbers = #tpu.dot_dimension_numbers<[1], [0], [0], [1], [0, 0, 1, 1], [], []>} : vector<8x160xbf16>, vector<160x384xbf16>, vector<8x384xf32> -> vector<8x384xf32>
    %c0_21 = arith.constant 0 : index
    %c0_22 = arith.constant 0 : index
    %28 = vector.load %arg8[%c0_21, %c0_22] : memref<1x384xf32, #tpu.memory_space<vmem>>, vector<1x384xf32>
    %29 = vector.broadcast %28 : vector<1x384xf32> to vector<8x384xf32>
    %30 = arith.addf %27, %29 : vector<8x384xf32>
    %c0_23 = arith.constant 0 : index
    %c0_24 = arith.constant 0 : index
    %31 = vector.load %arg9[%c0_23, %c0_24] : memref<8x384xf32, #tpu.memory_space<vmem>>, vector<8x384xf32>
    tpu.vector_store %arg9[%c0_23, %c0_24], %30 {strides = array<i32>} : memref<8x384xf32, #tpu.memory_space<vmem>>, vector<8x384xf32>,
    return
  }
}

</mosaic_0001>

<llo_original>
// kernel: psi_critic_forward.1
$region0: #{psi_critic_forward.1}
  #allocation0 [shape = 'u32[]', space=smem, size = 0x4, offset = 0x4, fixed_abs, tag = 'smem constant byte address 0x4 - core index']
  #allocation1 [shape = 'u32[144,128]{1,0:T(1,128)}', space=vmem, size = 0x12000, scoped, tag = 'internal scratch']
  %s0 = inlined_call_operand.hbm [shape: f32[8,32], index: 0, kind: input, shape index: {}]
  %s1 = inlined_call_operand.hbm [shape: bf16[32,160], index: 1, kind: input, shape index: {}]
  %s2 = inlined_call_operand.vmem [shape: f32[1,160], index: 2, kind: input, shape index: {}]
  %s3 = inlined_call_operand.hbm [shape: bf16[160,160], index: 3, kind: input, shape index: {}]
  %s4 = inlined_call_operand.vmem [shape: f32[1,160], index: 4, kind: input, shape index: {}]
  %s5 = inlined_call_operand.hbm [shape: bf16[160,160], index: 5, kind: input, shape index: {}]
  %s6 = inlined_call_operand.vmem [shape: f32[1,160], index: 6, kind: input, shape index: {}]
  %s7 = inlined_call_operand.hbm [shape: bf16[160,384], index: 7, kind: input, shape index: {}]
  %s8 = inlined_call_operand.vmem [shape: f32[1,384], index: 8, kind: input, shape index: {}]
  %s9 = inlined_call_operand.vmem [shape: f32[8,384], index: 9, kind: output, shape index: {}]
  %s10 = sld [smem:[#allocation0]]
  $region66: #{psi_critic_forward.1} parent=0
    _
  %s12 = ssub.s32 1, %s10
  %s13 = scalar_select 0, %s12, %s10
  $region1: #{psi_critic_forward.1} parent=0
    #allocation2 [shape = 'u8[4096]{0}', space=vmem, size = 0x1000, scoped, tag = 'input window, operand 0, single buffered']
    #allocation3 [shape = 's32[1]{0}', space=sflag, size = 0x4, scoped, tag = 'scoped memory for psi_critic_forward.1']
    #allocation4 [shape = 'u8[16384]{0}', space=vmem, size = 0x4000, scoped, tag = 'input window, operand 1, single buffered']
    #allocation5 [shape = 's32[1]{0}', space=sflag, size = 0x4, scoped, tag = 'scoped memory for psi_critic_forward.1']
    #allocation6 [shape = 'u8[81920]{0}', space=vmem, size = 0x14000, scoped, tag = 'input window, operand 3, single buffered']
    #allocation7 [shape = 'u8[81920]{0}', space=vmem, size = 0x14000, scoped, tag = 'input window, operand 5, single buffered']
    #allocation8 [shape = 's32[1]{0}', space=sflag, size = 0x4, scoped, tag = 'scoped memory for psi_critic_forward.1']
    #allocation9 [shape = 'u8[122880]{0}', space=vmem, size = 0x1e000, scoped, tag = 'input window, operand 7, single buffered']
    %14 = vsyncpa [#allocation3], 0
    %15 = vsyncpa [#allocation5], 0
    %16 = vsyncpa [#allocation8], 0
    // Predicated region
    $region2: #{psi_critic_forward.1} parent=1 // pred_check
      _
    $region3: #{psi_critic_forward.1} parent=1 // pred_check_branch
      %18 = sbr.rel (0) target = $region5
    $region4: #{psi_critic_forward.1} parent=1 // pred_region
      %s20 = ssub.s32 128, 128
      %21 = vsyncadd [#allocation3], %s20
      %s23 = sshll.u32 [#allocation2], 4
      %s24 = int_to_ptr.vmem [resolvable:$true] %s23
      %26 = dma.hbm_to_vmem [thread:$0]  %s0, 128, %s24, [#allocation3]
    $region5: #{psi_critic_forward.1} parent=1 // pred_fallthru
      _
    // Predicated region
    $region6: #{psi_critic_forward.1} parent=1 // pred_check
      _
    $region7: #{psi_critic_forward.1} parent=1 // pred_check_branch
      %28 = sbr.rel (0) target = $region9
    $region8: #{psi_critic_forward.1} parent=1 // pred_region
      %s30 = ssub.s32 512, 512
      %31 = vsyncadd [#allocation5], %s30
      %s32 = sshll.u32 [#allocation4], 4
      %s33 = int_to_ptr.vmem [resolvable:$true] %s32
      %38 = dma.hbm_to_vmem [thread:$0]  %s1, 512, %s33, [#allocation5], 128, 128, 8
    $region9: #{psi_critic_forward.1} parent=1 // pred_fallthru
      _
    // Predicated region
    $region10: #{psi_critic_forward.1} parent=1 // pred_check
      _
    $region11: #{psi_critic_forward.1} parent=1 // pred_check_branch
      %40 = sbr.rel (0) target = $region13
    $region12: #{psi_critic_forward.1} parent=1 // pred_region
      _
    $region13: #{psi_critic_forward.1} parent=1 // pred_fallthru
      _
    // Predicated region
    $region14: #{psi_critic_forward.1} parent=1 // pred_check
      _
    $region15: #{psi_critic_forward.1} parent=1 // pred_check_branch
      %42 = sbr.rel (0) target = $region17
    $region16: #{psi_critic_forward.1} parent=1 // pred_region
      %s44 = ssub.s32 2560, 2560
      %45 = vsyncadd [#allocation5], %s44
      %s46 = sshll.u32 [#allocation6], 4
      %s47 = int_to_ptr.vmem [resolvable:$true] %s46
      %52 = dma.hbm_to_vmem [thread:$0]  %s3, 2560, %s47, [#allocation5], 128, 128, 8
    $region17: #{psi_critic_forward.1} parent=1 // pred_fallthru
      _
    // Predicated region
    $region18: #{psi_critic_forward.1} parent=1 // pred_check
      _
    $region19: #{psi_critic_forward.1} parent=1 // pred_check_branch
      %54 = sbr.rel (0) target = $region21
    $region20: #{psi_critic_forward.1} parent=1 // pred_region
      _
    $region21: #{psi_critic_forward.1} parent=1 // pred_fallthru
      _
    // Predicated region
    $region22: #{psi_critic_forward.1} parent=1 // pred_check
      _
    $region23: #{psi_critic_forward.1} parent=1 // pred_check_branch
      %56 = sbr.rel (0) target = $region25
    $region24: #{psi_critic_forward.1} parent=1 // pred_region
      %s58 = ssub.s32 2560, 2560
      %59 = vsyncadd [#allocation8], %s58
      %s60 = sshll.u32 [#allocation7], 4
      %s61 = int_to_ptr.vmem [resolvable:$true] %s60
      %66 = dma.hbm_to_vmem [thread:$0]  %s5, 2560, %s61, [#allocation8], 128, 128, 8
    $region25: #{psi_critic_forward.1} parent=1 // pred_fallthru
      _
    // Predicated region
    $region26: #{psi_critic_forward.1} parent=1 // pred_check
      _
    $region27: #{psi_critic_forward.1} parent=1 // pred_check_branch
      %68 = sbr.rel (0) target = $region29
    $region28: #{psi_critic_forward.1} parent=1 // pred_region
      _
    $region29: #{psi_critic_forward.1} parent=1 // pred_fallthru
      _
    // Predicated region
    $region30: #{psi_critic_forward.1} parent=1 // pred_check
      _
    $region31: #{psi_critic_forward.1} parent=1 // pred_check_branch
      %70 = sbr.rel (0) target = $region33
    $region32: #{psi_critic_forward.1} parent=1 // pred_region
      %s72 = ssub.s32 3840, 3840
      %73 = vsyncadd [#allocation8], %s72
      %s74 = sshll.u32 [#allocation9], 4
      %s75 = int_to_ptr.vmem [resolvable:$true] %s74
      %80 = dma.hbm_to_vmem [thread:$0]  %s7, 3840, %s75, [#allocation8], 192, 192, 12
    $region33: #{psi_critic_forward.1} parent=1 // pred_fallthru
      _
    // Predicated region
    $region34: #{psi_critic_forward.1} parent=1 // pred_check
      _
    $region35: #{psi_critic_forward.1} parent=1 // pred_check_branch
      %82 = sbr.rel (0) target = $region37
    $region36: #{psi_critic_forward.1} parent=1 // pred_region
      _
    $region37: #{psi_critic_forward.1} parent=1 // pred_fallthru
      _
    // Predicated region
    $region38: #{psi_critic_forward.1} parent=1 // pred_check
      _
    $region39: #{psi_critic_forward.1} parent=1 // pred_check_branch
      %84 = sbr.rel (0) target = $region41
    $region40: #{psi_critic_forward.1} parent=1 // pred_region
      %85 = dma.done [#allocation3], 128
    $region41: #{psi_critic_forward.1} parent=1 // pred_fallthru
      _
    // Predicated region
    $region42: #{psi_critic_forward.1} parent=1 // pred_check
      _
    $region43: #{psi_critic_forward.1} parent=1 // pred_check_branch
      %87 = sbr.rel (0) target = $region45
    $region44: #{psi_critic_forward.1} parent=1 // pred_region
      %88 = dma.done [#allocation5], 512
    $region45: #{psi_critic_forward.1} parent=1 // pred_fallthru
      _
    // Predicated region
    $region46: #{psi_critic_forward.1} parent=1 // pred_check
      _
    $region47: #{psi_critic_forward.1} parent=1 // pred_check_branch
      %90 = sbr.rel (0) target = $region49
    $region48: #{psi_critic_forward.1} parent=1 // pred_region
      %91 = dma.done [#allocation5], 2560
    $region49: #{psi_critic_forward.1} parent=1 // pred_fallthru
      _
    // Predicated region
    $region50: #{psi_critic_forward.1} parent=1 // pred_check
      _
    $region51: #{psi_critic_forward.1} parent=1 // pred_check_branch
      %93 = sbr.rel (0) target = $region53
    $region52: #{psi_critic_forward.1} parent=1 // pred_region
      %94 = dma.done [#allocation8], 2560
    $region53: #{psi_critic_forward.1} parent=1 // pred_fallthru
      _
    // Predicated region
    $region54: #{psi_critic_forward.1} parent=1 // pred_check
      _
    $region55: #{psi_critic_forward.1} parent=1 // pred_check_branch
      %96 = sbr.rel (0) target = $region57
    $region56: #{psi_critic_forward.1} parent=1 // pred_region
      %97 = dma.done [#allocation8], 3840
    $region57: #{psi_critic_forward.1} parent=1 // pred_fallthru
      _
    %v99 = vld [vmem:[#allocation2] sm:$0xff]
    %v100 = vpack.c.bf16 %v99, %v99
    %v101 = vld [vmem:[#allocation4] sm:$0xff]
    %v102 = vld [vmem:[#allocation4 + $0x8] sm:$0xff]
    %v103 = vld [vmem:[#allocation4 + $0x10] sm:$0xff]
    %v104 = vld [vmem:[#allocation4 + $0x18] sm:$0xff]
    %v105 = vld [vmem:[%s2] sm:$0x3]
    %v107 = vlaneseq
    %v108 = vshrl.u32 %v107, 7
    %v109 = vsub.s32 0, %v108
    %v110 = vrot.slane %v105, %v109
    %v111 = vlaneseq
    %v112 = vshrl.u32 %v111, 7
    %v113 = vsub.s32 1, %v112
    %v114 = vrot.slane %v105, %v113
    %v121 = vunpack.c.l.b16 %v101
    %v122 = vunpack.c.h.b16 %v101
    %v123 = vunpack.c.l.b16 %v102
    %v124 = vunpack.c.h.b16 %v102
    %v125 = vunpack.c.l.b16 %v103
    %v126 = vunpack.c.h.b16 %v103
    %v127 = vunpack.c.l.b16 %v104
    %v128 = vunpack.c.h.b16 %v104
    %v129 = vpack.c.b16 %v123, %v121
    %v130 = vpack.c.b16 %v124, %v122
    %v131 = vpack.c.b16 %v127, %v125
    %v132 = vpack.c.b16 %v128, %v126
    %vm137 = vcmask 261120
    %v139 = vsel %vm137, %v100, 0
    %141 = vmatprep.subr.bf16.mxu0 %v130
    %142 = vmatpush1.bf16.msra.mxu0 %v129
    %143 = vmatprep.subr.bf16.mxu0 %v132
    %144 = vmatpush1.bf16.msra.mxu0 %v131
    %145 = vmatprep.subr.bf16.mxu0 0
    %146 = vmatpush1.bf16.msra.mxu0 0
    %147 = vmatprep.subr.bf16.mxu0 0
    %148 = vmatpush1.bf16.msra.mxu0 0
    %149 = vmatprep.subr.bf16.mxu0 0
    %150 = vmatpush1.bf16.msra.mxu0 0
    %151 = vmatprep.subr.bf16.mxu0 0
    %152 = vmatpush1.bf16.msra.mxu0 0
    %153 = vmatprep.subr.bf16.mxu0 0
    %154 = vmatpush1.bf16.msra.mxu0 0
    %155 = vmatprep.subr.bf16.mxu0 0
    %156 = vmatpush1.bf16.msra.mxu0 0
    %157 = vmatprep.subr.bf16.mxu0 0
    %158 = vmatpush1.bf16.msra.mxu0 0
    %159 = vmatprep.subr.bf16.mxu0 0
    %160 = vmatpush1.bf16.msra.mxu0 0
    %161 = vmatprep.subr.bf16.mxu0 0
    %162 = vmatpush1.bf16.msra.mxu0 0
    %163 = vmatprep.subr.bf16.mxu0 0
    %164 = vmatpush1.bf16.msra.mxu0 0
    %165 = vmatprep.subr.bf16.mxu0 0
    %166 = vmatpush1.bf16.msra.mxu0 0
    %167 = vmatprep.subr.bf16.mxu0 0
    %168 = vmatpush1.bf16.msra.mxu0 0
    %169 = vmatprep.subr.bf16.mxu0 0
    %170 = vmatpush1.bf16.msra.mxu0 0
    %171 = vmatprep.subr.bf16.mxu0 0
    %172 = vmatpush1.bf16.msra.mxu0 0
    %173 = vmatprep.mubr.bf16.mxu0 0
    %174 = vmatmul.mubr.bf16.gmra.mrb[0].mxu0 %v139
    %v175 = vpop.f32.mrb[0].mxu0
    %v176 = vadd.f32 %v110, %v175
    %v177 = vpop.f32.mrb[0].mxu0
    %v178 = vadd.f32 %v114, %v177
    %v179 = vpop.f32.mrb[0].mxu0
    %v180 = vpop.f32.mrb[0].mxu0
    %181 = vdwg.mxu0
    %v182 = vmax.f32 %v176, 0.0
    %v183 = vmax.f32 %v178, 0.0
    %v184 = vpack.c.bf16 %v182, %v182
    %v185 = vpack.c.bf16 %v183, %v183
    %v186 = vld [vmem:[#allocation6] sm:$0xff]
    %v187 = vld [vmem:[#allocation6 + $0x8] sm:$0xff]
    %v188 = vld [vmem:[#allocation6 + $0x10] sm:$0xff]
    %v189 = vld [vmem:[#allocation6 + $0x18] sm:$0xff]
    %v190 = vld [vmem:[#allocation6 + $0x20] sm:$0xff]
    %v191 = vld [vmem:[#allocation6 + $0x28] sm:$0xff]
    %v192 = vld [vmem:[#allocation6 + $0x30] sm:$0xff]
    %v193 = vld [vmem:[#allocation6 + $0x38] sm:$0xff]
    %v194 = vld [vmem:[#allocation6 + $0x40] sm:$0xff]
    %v195 = vld [vmem:[#allocation6 + $0x48] sm:$0xff]
    %v196 = vld [vmem:[#allocation6 + $0x50] sm:$0xff]
    %v197 = vld [vmem:[#allocation6 + $0x58] sm:$0xff]
    %v198 = vld [vmem:[#allocation6 + $0x60] sm:$0xff]
    %v199 = vld [vmem:[#allocation6 + $0x68] sm:$0xff]
    %v200 = vld [vmem:[#allocation6 + $0x70] sm:$0xff]
    %v201 = vld [vmem:[#allocation6 + $0x78] sm:$0xff]
    %v202 = vld [vmem:[#allocation6 + $0x80] sm:$0xff]
    %v203 = vld [vmem:[#allocation6 + $0x88] sm:$0xff]
    %v204 = vld [vmem:[#allocation6 + $0x90] sm:$0xff]
    %v205 = vld [vmem:[#allocation6 + $0x98] sm:$0xff]
    %v206 = vld [vmem:[%s4] sm:$0x3]
    %v208 = vlaneseq
    %v209 = vshrl.u32 %v208, 7
    %v210 = vsub.s32 0, %v209
    %v211 = vrot.slane %v206, %v210
    %v212 = vlaneseq
    %v213 = vshrl.u32 %v212, 7
    %v214 = vsub.s32 1, %v213
    %v215 = vrot.slane %v206, %v214
    %v238 = vunpack.c.l.b16 %v186
    %v239 = vunpack.c.h.b16 %v186
    %v240 = vunpack.c.l.b16 %v187
    %v241 = vunpack.c.h.b16 %v187
    %v242 = vunpack.c.l.b16 %v188
    %v243 = vunpack.c.h.b16 %v188
    %v244 = vunpack.c.l.b16 %v189
    %v245 = vunpack.c.h.b16 %v189
    %v246 = vunpack.c.l.b16 %v190
    %v247 = vunpack.c.h.b16 %v190
    %v248 = vunpack.c.l.b16 %v191
    %v249 = vunpack.c.h.b16 %v191
    %v250 = vunpack.c.l.b16 %v192
    %v251 = vunpack.c.h.b16 %v192
    %v252 = vunpack.c.l.b16 %v193
    %v253 = vunpack.c.h.b16 %v193
    %v254 = vunpack.c.l.b16 %v194
    %v255 = vunpack.c.h.b16 %v194
    %v256 = vunpack.c.l.b16 %v195
    %v257 = vunpack.c.h.b16 %v195
    %v258 = vunpack.c.l.b16 %v196
    %v259 = vunpack.c.h.b16 %v196
    %v260 = vunpack.c.l.b16 %v197
    %v261 = vunpack.c.h.b16 %v197
    %v262 = vunpack.c.l.b16 %v198
    %v263 = vunpack.c.h.b16 %v198
    %v264 = vunpack.c.l.b16 %v199
    %v265 = vunpack.c.h.b16 %v199
    %v266 = vunpack.c.l.b16 %v200
    %v267 = vunpack.c.h.b16 %v200
    %v268 = vunpack.c.l.b16 %v201
    %v269 = vunpack.c.h.b16 %v201
    %v270 = vunpack.c.l.b16 %v202
    %v271 = vunpack.c.h.b16 %v202
    %v272 = vunpack.c.l.b16 %v203
    %v273 = vunpack.c.h.b16 %v203
    %v274 = vunpack.c.l.b16 %v204
    %v275 = vunpack.c.h.b16 %v204
    %v276 = vunpack.c.l.b16 %v205
    %v277 = vunpack.c.h.b16 %v205
    %v278 = vpack.c.b16 %v240, %v238
    %v279 = vpack.c.b16 %v241, %v239
    %v280 = vpack.c.b16 %v244, %v242
    %v281 = vpack.c.b16 %v245, %v243
    %v282 = vpack.c.b16 %v248, %v246
    %v283 = vpack.c.b16 %v249, %v247
    %v284 = vpack.c.b16 %v252, %v250
    %v285 = vpack.c.b16 %v253, %v251
    %v286 = vpack.c.b16 %v256, %v254
    %v287 = vpack.c.b16 %v257, %v255
    %v288 = vpack.c.b16 %v260, %v258
    %v289 = vpack.c.b16 %v261, %v259
    %v290 = vpack.c.b16 %v264, %v262
    %v291 = vpack.c.b16 %v265, %v263
    %v292 = vpack.c.b16 %v268, %v266
    %v293 = vpack.c.b16 %v269, %v267
    %v294 = vpack.c.b16 %v272, %v270
    %v295 = vpack.c.b16 %v273, %v271
    %v296 = vpack.c.b16 %v276, %v274
    %v297 = vpack.c.b16 %v277, %v275
    %v319 = vsel %vm137, %v185, 0
    %321 = vmatprep.subr.bf16.mxu0 %v279
    %322 = vmatpush1.bf16.msra.mxu0 %v278
    %323 = vmatprep.subr.bf16.mxu0 %v281
    %324 = vmatpush1.bf16.msra.mxu0 %v280
    %325 = vmatprep.subr.bf16.mxu0 %v283
    %326 = vmatpush1.bf16.msra.mxu0 %v282
    %327 = vmatprep.subr.bf16.mxu0 %v285
    %328 = vmatpush1.bf16.msra.mxu0 %v284
    %329 = vmatprep.subr.bf16.mxu0 %v287
    %330 = vmatpush1.bf16.msra.mxu0 %v286
    %331 = vmatprep.subr.bf16.mxu0 %v289
    %332 = vmatpush1.bf16.msra.mxu0 %v288
    %333 = vmatprep.subr.bf16.mxu0 %v291
    %334 = vmatpush1.bf16.msra.mxu0 %v290
    %335 = vmatprep.subr.bf16.mxu0 %v293
    %336 = vmatpush1.bf16.msra.mxu0 %v292
    %337 = vmatprep.subr.bf16.mxu0 %v295
    %338 = vmatpush1.bf16.msra.mxu0 %v294
    %339 = vmatprep.subr.bf16.mxu0 %v297
    %340 = vmatpush1.bf16.msra.mxu0 %v296
    %341 = vmatprep.subr.bf16.mxu0 0
    %342 = vmatpush1.bf16.msra.mxu0 0
    %343 = vmatprep.subr.bf16.mxu0 0
    %344 = vmatpush1.bf16.msra.mxu0 0
    %345 = vmatprep.subr.bf16.mxu0 0
    %346 = vmatpush1.bf16.msra.mxu0 0
    %347 = vmatprep.subr.bf16.mxu0 0
    %348 = vmatpush1.bf16.msra.mxu0 0
    %349 = vmatprep.subr.bf16.mxu0 0
    %350 = vmatpush1.bf16.msra.mxu0 0
    %351 = vmatprep.subr.bf16.mxu0 0
    %352 = vmatpush1.bf16.msra.mxu0 0
    %353 = vmatprep.mubr.bf16.mxu0 %v319
    %354 = vmatmul.mubr.bf16.gmra.mrb[0].mxu0 %v184
    %v355 = vpop.f32.mrb[0].mxu0
    %v356 = vadd.f32 %v211, %v355
    %v357 = vpop.f32.mrb[0].mxu0
    %v358 = vadd.f32 %v215, %v357
    %v359 = vpop.f32.mrb[0].mxu0
    %v360 = vpop.f32.mrb[0].mxu0
    %361 = vdwg.mxu0
    %v362 = vmax.f32 %v356, 0.0
    %v363 = vmax.f32 %v358, 0.0
    %v364 = vpack.c.bf16 %v362, %v362
    %v365 = vpack.c.bf16 %v363, %v363
    %v366 = vld [vmem:[#allocation7] sm:$0xff]
    %v367 = vld [vmem:[#allocation7 + $0x8] sm:$0xff]
    %v368 = vld [vmem:[#allocation7 + $0x10] sm:$0xff]
    %v369 = vld [vmem:[#allocation7 + $0x18] sm:$0xff]
    %v370 = vld [vmem:[#allocation7 + $0x20] sm:$0xff]
    %v371 = vld [vmem:[#allocation7 + $0x28] sm:$0xff]
    %v372 = vld [vmem:[#allocation7 + $0x30] sm:$0xff]
    %v373 = vld [vmem:[#allocation7 + $0x38] sm:$0xff]
    %v374 = vld [vmem:[#allocation7 + $0x40] sm:$0xff]
    %v375 = vld [vmem:[#allocation7 + $0x48] sm:$0xff]
    %v376 = vld [vmem:[#allocation7 + $0x50] sm:$0xff]
    %v377 = vld [vmem:[#allocation7 + $0x58] sm:$0xff]
    %v378 = vld [vmem:[#allocation7 + $0x60] sm:$0xff]
    %v379 = vld [vmem:[#allocation7 + $0x68] sm:$0xff]
    %v380 = vld [vmem:[#allocation7 + $0x70] sm:$0xff]
    %v381 = vld [vmem:[#allocation7 + $0x78] sm:$0xff]
    %v382 = vld [vmem:[#allocation7 + $0x80] sm:$0xff]
    %v383 = vld [vmem:[#allocation7 + $0x88] sm:$0xff]
    %v384 = vld [vmem:[#allocation7 + $0x90] sm:$0xff]
    %v385 = vld [vmem:[#allocation7 + $0x98] sm:$0xff]
    %v386 = vld [vmem:[%s6] sm:$0x3]
    %v388 = vlaneseq
    %v389 = vshrl.u32 %v388, 7
    %v390 = vsub.s32 0, %v389
    %v391 = vrot.slane %v386, %v390
    %v392 = vlaneseq
    %v393 = vshrl.u32 %v392, 7
    %v394 = vsub.s32 1, %v393
    %v395 = vrot.slane %v386, %v394
    %v418 = vunpack.c.l.b16 %v366
    %v419 = vunpack.c.h.b16 %v366
    %v420 = vunpack.c.l.b16 %v367
    %v421 = vunpack.c.h.b16 %v367
    %v422 = vunpack.c.l.b16 %v368
    %v423 = vunpack.c.h.b16 %v368
    %v424 = vunpack.c.l.b16 %v369
    %v425 = vunpack.c.h.b16 %v369
    %v426 = vunpack.c.l.b16 %v370
    %v427 = vunpack.c.h.b16 %v370
    %v428 = vunpack.c.l.b16 %v371
    %v429 = vunpack.c.h.b16 %v371
    %v430 = vunpack.c.l.b16 %v372
    %v431 = vunpack.c.h.b16 %v372
    %v432 = vunpack.c.l.b16 %v373
    %v433 = vunpack.c.h.b16 %v373
    %v434 = vunpack.c.l.b16 %v374
    %v435 = vunpack.c.h.b16 %v374
    %v436 = vunpack.c.l.b16 %v375
    %v437 = vunpack.c.h.b16 %v375
    %v438 = vunpack.c.l.b16 %v376
    %v439 = vunpack.c.h.b16 %v376
    %v440 = vunpack.c.l.b16 %v377
    %v441 = vunpack.c.h.b16 %v377
    %v442 = vunpack.c.l.b16 %v378
    %v443 = vunpack.c.h.b16 %v378
    %v444 = vunpack.c.l.b16 %v379
    %v445 = vunpack.c.h.b16 %v379
    %v446 = vunpack.c.l.b16 %v380
    %v447 = vunpack.c.h.b16 %v380
    %v448 = vunpack.c.l.b16 %v381
    %v449 = vunpack.c.h.b16 %v381
    %v450 = vunpack.c.l.b16 %v382
    %v451 = vunpack.c.h.b16 %v382
    %v452 = vunpack.c.l.b16 %v383
    %v453 = vunpack.c.h.b16 %v383
    %v454 = vunpack.c.l.b16 %v384
    %v455 = vunpack.c.h.b16 %v384
    %v456 = vunpack.c.l.b16 %v385
    %v457 = vunpack.c.h.b16 %v385
    %v458 = vpack.c.b16 %v420, %v418
    %v459 = vpack.c.b16 %v421, %v419
    %v460 = vpack.c.b16 %v424, %v422
    %v461 = vpack.c.b16 %v425, %v423
    %v462 = vpack.c.b16 %v428, %v426
    %v463 = vpack.c.b16 %v429, %v427
    %v464 = vpack.c.b16 %v432, %v430
    %v465 = vpack.c.b16 %v433, %v431
    %v466 = vpack.c.b16 %v436, %v434
    %v467 = vpack.c.b16 %v437, %v435
    %v468 = vpack.c.b16 %v440, %v438
    %v469 = vpack.c.b16 %v441, %v439
    %v470 = vpack.c.b16 %v444, %v442
    %v471 = vpack.c.b16 %v445, %v443
    %v472 = vpack.c.b16 %v448, %v446
    %v473 = vpack.c.b16 %v449, %v447
    %v474 = vpack.c.b16 %v452, %v450
    %v475 = vpack.c.b16 %v453, %v451
    %v476 = vpack.c.b16 %v456, %v454
    %v477 = vpack.c.b16 %v457, %v455
    %v499 = vsel %vm137, %v365, 0
    %501 = vmatprep.subr.bf16.mxu0 %v459
    %502 = vmatpush1.bf16.msra.mxu0 %v458
    %503 = vmatprep.subr.bf16.mxu0 %v461
    %504 = vmatpush1.bf16.msra.mxu0 %v460
    %505 = vmatprep.subr.bf16.mxu0 %v463
    %506 = vmatpush1.bf16.msra.mxu0 %v462
    %507 = vmatprep.subr.bf16.mxu0 %v465
    %508 = vmatpush1.bf16.msra.mxu0 %v464
    %509 = vmatprep.subr.bf16.mxu0 %v467
    %510 = vmatpush1.bf16.msra.mxu0 %v466
    %511 = vmatprep.subr.bf16.mxu0 %v469
    %512 = vmatpush1.bf16.msra.mxu0 %v468
    %513 = vmatprep.subr.bf16.mxu0 %v471
    %514 = vmatpush1.bf16.msra.mxu0 %v470
    %515 = vmatprep.subr.bf16.mxu0 %v473
    %516 = vmatpush1.bf16.msra.mxu0 %v472
    %517 = vmatprep.subr.bf16.mxu0 %v475
    %518 = vmatpush1.bf16.msra.mxu0 %v474
    %519 = vmatprep.subr.bf16.mxu0 %v477
    %520 = vmatpush1.bf16.msra.mxu0 %v476
    %521 = vmatprep.subr.bf16.mxu0 0
    %522 = vmatpush1.bf16.msra.mxu0 0
    %523 = vmatprep.subr.bf16.mxu0 0
    %524 = vmatpush1.bf16.msra.mxu0 0
    %525 = vmatprep.subr.bf16.mxu0 0
    %526 = vmatpush1.bf16.msra.mxu0 0
    %527 = vmatprep.subr.bf16.mxu0 0
    %528 = vmatpush1.bf16.msra.mxu0 0
    %529 = vmatprep.subr.bf16.mxu0 0
    %530 = vmatpush1.bf16.msra.mxu0 0
    %531 = vmatprep.subr.bf16.mxu0 0
    %532 = vmatpush1.bf16.msra.mxu0 0
    %533 = vmatprep.mubr.bf16.mxu0 %v499
    %534 = vmatmul.mubr.bf16.gmra.mrb[0].mxu0 %v364
    %v535 = vpop.f32.mrb[0].mxu0
    %v536 = vadd.f32 %v391, %v535
    %v537 = vpop.f32.mrb[0].mxu0
    %v538 = vadd.f32 %v395, %v537
    %v539 = vpop.f32.mrb[0].mxu0
    %v540 = vpop.f32.mrb[0].mxu0
    %541 = vdwg.mxu0
    %v542 = vmax.f32 %v536, 0.0
    %v543 = vmax.f32 %v538, 0.0
    %v544 = vpack.c.bf16 %v542, %v542
    %v545 = vpack.c.bf16 %v543, %v543
    %v546 = vld [vmem:[#allocation9] sm:$0xff]
    %v547 = vld [vmem:[#allocation9 + $0x8] sm:$0xf]
    %v548 = vld [vmem:[#allocation9 + $0xc] sm:$0xff]
    %v549 = vld [vmem:[#allocation9 + $0x14] sm:$0xf]
    %v550 = vld [vmem:[#allocation9 + $0x18] sm:$0xff]
    %v551 = vld [vmem:[#allocation9 + $0x20] sm:$0xf]
    %v552 = vld [vmem:[#allocation9 + $0x24] sm:$0xff]
    %v553 = vld [vmem:[#allocation9 + $0x2c] sm:$0xf]
    %v554 = vld [vmem:[#allocation9 + $0x30] sm:$0xff]
    %v555 = vld [vmem:[#allocation9 + $0x38] sm:$0xf]
    %v556 = vld [vmem:[#allocation9 + $0x3c] sm:$0xff]
    %v557 = vld [vmem:[#allocation9 + $0x44] sm:$0xf]
    %v558 = vld [vmem:[#allocation9 + $0x48] sm:$0xff]
    %v559 = vld [vmem:[#allocation9 + $0x50] sm:$0xf]
    %v560 = vld [vmem:[#allocation9 + $0x54] sm:$0xff]
    %v561 = vld [vmem:[#allocation9 + $0x5c] sm:$0xf]
    %v562 = vld [vmem:[#allocation9 + $0x60] sm:$0xff]
    %v563 = vld [vmem:[#allocation9 + $0x68] sm:$0xf]
    %v564 = vld [vmem:[#allocation9 + $0x6c] sm:$0xff]
    %v565 = vld [vmem:[#allocation9 + $0x74] sm:$0xf]
    %v566 = vld [vmem:[#allocation9 + $0x78] sm:$0xff]
    %v567 = vld [vmem:[#allocation9 + $0x80] sm:$0xf]
    %v568 = vld [vmem:[#allocation9 + $0x84] sm:$0xff]
    %v569 = vld [vmem:[#allocation9 + $0x8c] sm:$0xf]
    %v570 = vld [vmem:[#allocation9 + $0x90] sm:$0xff]
    %v571 = vld [vmem:[#allocation9 + $0x98] sm:$0xf]
    %v572 = vld [vmem:[#allocation9 + $0x9c] sm:$0xff]
    %v573 = vld [vmem:[#allocation9 + $0xa4] sm:$0xf]
    %v574 = vld [vmem:[#allocation9 + $0xa8] sm:$0xff]
    %v575 = vld [vmem:[#allocation9 + $0xb0] sm:$0xf]
    %v576 = vld [vmem:[#allocation9 + $0xb4] sm:$0xff]
    %v577 = vld [vmem:[#allocation9 + $0xbc] sm:$0xf]
    %v578 = vld [vmem:[#allocation9 + $0xc0] sm:$0xff]
    %v579 = vld [vmem:[#allocation9 + $0xc8] sm:$0xf]
    %v580 = vld [vmem:[#allocation9 + $0xcc] sm:$0xff]
    %v581 = vld [vmem:[#allocation9 + $0xd4] sm:$0xf]
    %v582 = vld [vmem:[#allocation9 + $0xd8] sm:$0xff]
    %v583 = vld [vmem:[#allocation9 + $0xe0] sm:$0xf]
    %v584 = vld [vmem:[#allocation9 + $0xe4] sm:$0xff]
    %v585 = vld [vmem:[#allocation9 + $0xec] sm:$0xf]
    %v586 = vld [vmem:[%s8] sm:$0x7]
    %v588 = vlaneseq
    %v589 = vshrl.u32 %v588, 7
    %v590 = vsub.s32 0, %v589
    %v591 = vrot.slane %v586, %v590
    %v592 = vlaneseq
    %v593 = vshrl.u32 %v592, 7
    %v594 = vsub.s32 1, %v593
    %v595 = vrot.slane %v586, %v594
    %v596 = vlaneseq
    %v597 = vshrl.u32 %v596, 7
    %v598 = vsub.s32 2, %v597
    %v599 = vrot.slane %v586, %v598
    %v643 = vunpack.c.l.b16 %v546
    %v644 = vunpack.c.h.b16 %v546
    %v645 = vunpack.c.l.b16 %v547
    %v646 = vunpack.c.l.b16 %v548
    %v647 = vunpack.c.h.b16 %v548
    %v648 = vunpack.c.l.b16 %v549
    %v649 = vunpack.c.l.b16 %v550
    %v650 = vunpack.c.h.b16 %v550
    %v651 = vunpack.c.l.b16 %v551
    %v652 = vunpack.c.l.b16 %v552
    %v653 = vunpack.c.h.b16 %v552
    %v654 = vunpack.c.l.b16 %v553
    %v655 = vunpack.c.l.b16 %v554
    %v656 = vunpack.c.h.b16 %v554
    %v657 = vunpack.c.l.b16 %v555
    %v658 = vunpack.c.l.b16 %v556
    %v659 = vunpack.c.h.b16 %v556
    %v660 = vunpack.c.l.b16 %v557
    %v661 = vunpack.c.l.b16 %v558
    %v662 = vunpack.c.h.b16 %v558
    %v663 = vunpack.c.l.b16 %v559
    %v664 = vunpack.c.l.b16 %v560
    %v665 = vunpack.c.h.b16 %v560
    %v666 = vunpack.c.l.b16 %v561
    %v667 = vunpack.c.l.b16 %v562
    %v668 = vunpack.c.h.b16 %v562
    %v669 = vunpack.c.l.b16 %v563
    %v670 = vunpack.c.l.b16 %v564
    %v671 = vunpack.c.h.b16 %v564
    %v672 = vunpack.c.l.b16 %v565
    %v673 = vunpack.c.l.b16 %v566
    %v674 = vunpack.c.h.b16 %v566
    %v675 = vunpack.c.l.b16 %v567
    %v676 = vunpack.c.l.b16 %v568
    %v677 = vunpack.c.h.b16 %v568
    %v678 = vunpack.c.l.b16 %v569
    %v679 = vunpack.c.l.b16 %v570
    %v680 = vunpack.c.h.b16 %v570
    %v681 = vunpack.c.l.b16 %v571
    %v682 = vunpack.c.l.b16 %v572
    %v683 = vunpack.c.h.b16 %v572
    %v684 = vunpack.c.l.b16 %v573
    %v685 = vunpack.c.l.b16 %v574
    %v686 = vunpack.c.h.b16 %v574
    %v687 = vunpack.c.l.b16 %v575
    %v688 = vunpack.c.l.b16 %v576
    %v689 = vunpack.c.h.b16 %v576
    %v690 = vunpack.c.l.b16 %v577
    %v691 = vunpack.c.l.b16 %v578
    %v692 = vunpack.c.h.b16 %v578
    %v693 = vunpack.c.l.b16 %v579
    %v694 = vunpack.c.l.b16 %v580
    %v695 = vunpack.c.h.b16 %v580
    %v696 = vunpack.c.l.b16 %v581
    %v697 = vunpack.c.l.b16 %v582
    %v698 = vunpack.c.h.b16 %v582
    %v699 = vunpack.c.l.b16 %v583
    %v700 = vunpack.c.l.b16 %v584
    %v701 = vunpack.c.h.b16 %v584
    %v702 = vunpack.c.l.b16 %v585
    %v703 = vpack.c.b16 %v646, %v643
    %v704 = vpack.c.b16 %v647, %v644
    %v705 = vpack.c.b16 %v648, %v645
    %v706 = vpack.c.b16 %v652, %v649
    %v707 = vpack.c.b16 %v653, %v650
    %v708 = vpack.c.b16 %v654, %v651
    %v709 = vpack.c.b16 %v658, %v655
    %v710 = vpack.c.b16 %v659, %v656
    %v711 = vpack.c.b16 %v660, %v657
    %v712 = vpack.c.b16 %v664, %v661
    %v713 = vpack.c.b16 %v665, %v662
    %v714 = vpack.c.b16 %v666, %v663
    %v715 = vpack.c.b16 %v670, %v667
    %v716 = vpack.c.b16 %v671, %v668
    %v717 = vpack.c.b16 %v672, %v669
    %v718 = vpack.c.b16 %v676, %v673
    %v719 = vpack.c.b16 %v677, %v674
    %v720 = vpack.c.b16 %v678, %v675
    %v721 = vpack.c.b16 %v682, %v679
    %v722 = vpack.c.b16 %v683, %v680
    %v723 = vpack.c.b16 %v684, %v681
    %v724 = vpack.c.b16 %v688, %v685
    %v725 = vpack.c.b16 %v689, %v686
    %v726 = vpack.c.b16 %v690, %v687
    %v727 = vpack.c.b16 %v694, %v691
    %v728 = vpack.c.b16 %v695, %v692
    %v729 = vpack.c.b16 %v696, %v693
    %v730 = vpack.c.b16 %v700, %v697
    %v731 = vpack.c.b16 %v701, %v698
    %v732 = vpack.c.b16 %v702, %v699
    %v764 = vsel %vm137, %v545, 0
    %766 = vmatprep.subr.bf16.mxu0 %v704
    %767 = vmatpush1.bf16.msra.mxu0 %v703
    %768 = vmatprep.subr.bf16.mxu0 %v707
    %769 = vmatpush1.bf16.msra.mxu0 %v706
    %770 = vmatprep.subr.bf16.mxu0 %v710
    %771 = vmatpush1.bf16.msra.mxu0 %v709
    %772 = vmatprep.subr.bf16.mxu0 %v713
    %773 = vmatpush1.bf16.msra.mxu0 %v712
    %774 = vmatprep.subr.bf16.mxu0 %v716
    %775 = vmatpush1.bf16.msra.mxu0 %v715
    %776 = vmatprep.subr.bf16.mxu0 %v719
    %777 = vmatpush1.bf16.msra.mxu0 %v718
    %778 = vmatprep.subr.bf16.mxu0 %v722
    %779 = vmatpush1.bf16.msra.mxu0 %v721
    %780 = vmatprep.subr.bf16.mxu0 %v725
    %781 = vmatpush1.bf16.msra.mxu0 %v724
    %782 = vmatprep.subr.bf16.mxu0 %v728
    %783 = vmatpush1.bf16.msra.mxu0 %v727
    %784 = vmatprep.subr.bf16.mxu0 %v731
    %785 = vmatpush1.bf16.msra.mxu0 %v730
    %786 = vmatprep.subr.bf16.mxu0 0
    %787 = vmatpush1.bf16.msra.mxu0 0
    %788 = vmatprep.subr.bf16.mxu0 0
    %789 = vmatpush1.bf16.msra.mxu0 0
    %790 = vmatprep.subr.bf16.mxu0 0
    %791 = vmatpush1.bf16.msra.mxu0 0
    %792 = vmatprep.subr.bf16.mxu0 0
    %793 = vmatpush1.bf16.msra.mxu0 0
    %794 = vmatprep.subr.bf16.mxu0 0
    %795 = vmatpush1.bf16.msra.mxu0 0
    %796 = vmatprep.subr.bf16.mxu0 0
    %797 = vmatpush1.bf16.msra.mxu0 0
    %798 = vmatprep.mubr.bf16.mxu0 %v764
    %799 = vmatmul.mubr.bf16.gmra.mrb[0].mxu0 %v544
    %v800 = vpop.f32.mrb[0].mxu0
    %v801 = vadd.f32 %v591, %v800
    %v802 = vpop.f32.mrb[0].mxu0
    %v803 = vadd.f32 %v595, %v802
    %v804 = vpop.f32.mrb[0].mxu0
    %v805 = vpop.f32.mrb[0].mxu0
    %806 = vdwg.mxu0
    %807 = vmatprep.subr.bf16.mxu0 0
    %808 = vmatpush1.bf16.msra.mxu0 %v705
    %809 = vmatprep.subr.bf16.mxu0 0
    %810 = vmatpush1.bf16.msra.mxu0 %v708
    %811 = vmatprep.subr.bf16.mxu0 0
    %812 = vmatpush1.bf16.msra.mxu0 %v711
    %813 = vmatprep.subr.bf16.mxu0 0
    %814 = vmatpush1.bf16.msra.mxu0 %v714
    %815 = vmatprep.subr.bf16.mxu0 0
    %816 = vmatpush1.bf16.msra.mxu0 %v717
    %817 = vmatprep.subr.bf16.mxu0 0
    %818 = vmatpush1.bf16.msra.mxu0 %v720
    %819 = vmatprep.subr.bf16.mxu0 0
    %820 = vmatpush1.bf16.msra.mxu0 %v723
    %821 = vmatprep.subr.bf16.mxu0 0
    %822 = vmatpush1.bf16.msra.mxu0 %v726
    %823 = vmatprep.subr.bf16.mxu0 0
    %824 = vmatpush1.bf16.msra.mxu0 %v729
    %825 = vmatprep.subr.bf16.mxu0 0
    %826 = vmatpush1.bf16.msra.mxu0 %v732
    %827 = vmatprep.subr.bf16.mxu0 0
    %828 = vmatpush1.bf16.msra.mxu0 0
    %829 = vmatprep.subr.bf16.mxu0 0
    %830 = vmatpush1.bf16.msra.mxu0 0
    %831 = vmatprep.subr.bf16.mxu0 0
    %832 = vmatpush1.bf16.msra.mxu0 0
    %833 = vmatprep.subr.bf16.mxu0 0
    %834 = vmatpush1.bf16.msra.mxu0 0
    %835 = vmatprep.subr.bf16.mxu0 0
    %836 = vmatpush1.bf16.msra.mxu0 0
    %837 = vmatprep.subr.bf16.mxu0 0
    %838 = vmatpush1.bf16.msra.mxu0 0
    %839 = vmatprep.mubr.bf16.mxu0 %v764
    %840 = vmatmul.mubr.bf16.gmra.mrb[0].mxu0 %v544
    %v841 = vpop.f32.mrb[0].mxu0
    %v842 = vadd.f32 %v599, %v841
    %v843 = vpop.f32.mrb[0].mxu0
    %v844 = vpop.f32.mrb[0].mxu0
    %v845 = vpop.f32.mrb[0].mxu0
    %846 = vdwg.mxu0
    %847 = vst [vmem:[%s9] sm:$0xff] %v801
    %848 = vst [vmem:[%s9 + $0x8] sm:$0xff] %v803
    %849 = vst [vmem:[%s9 + $0x10] sm:$0xff] %v842
    // Predicated region
    $region58: #{psi_critic_forward.1} parent=1 // pred_check
      _
    $region59: #{psi_critic_forward.1} parent=1 // pred_check_branch
      %851 = sbr.rel (0) target = $region61
    $region60: #{psi_critic_forward.1} parent=1 // pred_region
      _
    $region61: #{psi_critic_forward.1} parent=1 // pred_fallthru
      _
    // Predicated region
    $region62: #{psi_critic_forward.1} parent=1 // pred_check
      _
    $region63: #{psi_critic_forward.1} parent=1 // pred_check_branch
      %853 = sbr.rel (0) target = $region65
    $region64: #{psi_critic_forward.1} parent=1 // pred_region
      _
    $region65: #{psi_critic_forward.1} parent=1 // pred_fallthru
      _
    %854 = vsyncpa [#allocation3], 1
    %855 = vsyncpa [#allocation5], 1
    %856 = vsyncpa [#allocation8], 1

</llo_original>
